<compile_context>
chip_gen: v6e
topology: v6e:2x2x1
jax: 0.10.0
libtpu: 0.0.40
codegen_flags: <defaults>
</compile_context>

<pallas_src>
import functools

import jax
import jax.numpy as jnp
from jax.experimental import pallas as pl
from jax.experimental.pallas import tpu as pltpu

_EPS = 1e-5
_LANE = 128
_ROW_TILE = 512   # row tile for all kernels; K-tiling keeps the sage VMEM footprint ~1-2 MiB
_K_TILE = 512     # neighbor-axis tile for the aggregation matmul


def _round_up(v, m):
    return (v + m - 1) // m * m


def _pad2(a, rows, cols):
    return jnp.pad(a, ((0, rows - a.shape[0]), (0, cols - a.shape[1])))


# ----------------------------------------------------------------------------- kernels
def _sage_kernel(n_valid, tm, a_ref, xk_ref, xs_ref, invdeg_ref, wl_ref, wr_ref, b_ref,
                 z_ref, stats_ref, acc_ref):
    """K-tiled fused SAGEConv for one row block.

    Accumulates agg = sum_k A[i,k] @ X[k] in f32 scratch; on the last k step scales by
    inv_deg, applies the two weight matmuls + bias, and emits z plus masked per-tile
    BatchNorm statistic partials (sum, sum of squares) packed as (1, 2, F)."""
    i = pl.program_id(0)
    k = pl.program_id(1)
    nk = pl.num_programs(1)

    @pl.when(k == 0)
    def _():
        acc_ref[...] = jnp.zeros_like(acc_ref)

    acc_ref[...] += jnp.dot(a_ref[...], xk_ref[...], preferred_element_type=jnp.float32)

    @pl.when(k == nk - 1)
    def _():
        agg = acc_ref[...] * invdeg_ref[...]                     # f32 mean aggregation
        z = (jnp.dot(agg.astype(jnp.bfloat16), wl_ref[...],
                     preferred_element_type=jnp.float32)
             + jnp.dot(xs_ref[...], wr_ref[...],
                       preferred_element_type=jnp.float32)
             + b_ref[...])
        z_ref[...] = z.astype(z_ref.dtype)

        # masked partial batch statistics (exclude zero-padded rows from BN stats)
        row = i * tm + jax.lax.broadcasted_iota(jnp.int32, (tm, 1), 0)
        zm = jnp.where(row < n_valid, z, 0.0)
        s = jnp.sum(zm, axis=0, keepdims=True)                   # (1, F)
        ss = jnp.sum(zm * zm, axis=0, keepdims=True)             # (1, F)
        stats_ref[...] = jnp.concatenate([s, ss], axis=0)[None]  # (1, 2, F)


def _bn_relu_kernel(z_ref, scale_ref, shift_ref, h_ref):
    """h = relu(z * scale + shift)  (per-feature scale/shift precomputed, f32 math)."""
    z = z_ref[...].astype(jnp.float32)
    h = jnp.maximum(z * scale_ref[...] + shift_ref[...], 0.0)
    h_ref[...] = h.astype(h_ref.dtype)


def _bn_relu_residual_kernel(z_ref, scale_ref, shift_ref, x_ref, wres_ref, bres_ref, out_ref):
    """out = relu(z * scale + shift) + (x @ Wres^T + bres); residual computed late."""
    z = z_ref[...].astype(jnp.float32)
    h = jnp.maximum(z * scale_ref[...] + shift_ref[...], 0.0)
    res = jnp.dot(x_ref[...], wres_ref[...], preferred_element_type=jnp.float32) + bres_ref[...]
    out_ref[...] = (h + res).astype(out_ref.dtype)


# ----------------------------------------------------------------------------- pallas_call wrappers
def _sage_call(a_p, x_p, inv_deg, w_l, w_r, bias, n_valid, tm, tk):
    n_p = a_p.shape[0]
    f_in = x_p.shape[1]
    f_out = w_l.shape[1]
    nb = n_p // tm
    kb = n_p // tk
    cost = pl.CostEstimate(
        flops=2 * n_p * n_p * f_in + 4 * n_p * f_in * f_out,
        transcendentals=0,
        bytes_accessed=(a_p.size * 2 + 2 * x_p.size * 2
                        + (w_l.size + w_r.size) * 2 + n_p * f_out * 2),
    )
    return pl.pallas_call(
        functools.partial(_sage_kernel, n_valid, tm),
        grid=(nb, kb),
        in_specs=[
            pl.BlockSpec((tm, tk), lambda i, k: (i, k)),        # A block (streamed)
            pl.BlockSpec((tk, f_in), lambda i, k: (k, 0)),      # X k-block (aggregation operand)
            pl.BlockSpec((tm, f_in), lambda i, k: (i, 0)),      # X self block (const along k)
            pl.BlockSpec((tm, 1), lambda i, k: (i, 0)),         # f32 inverse degree
            pl.BlockSpec((f_in, f_out), lambda i, k: (0, 0)),   # W_l^T (resident)
            pl.BlockSpec((f_in, f_out), lambda i, k: (0, 0)),   # W_r^T (resident)
            pl.BlockSpec((1, f_out), lambda i, k: (0, 0)),      # bias
        ],
        out_specs=(
            pl.BlockSpec((tm, f_out), lambda i, k: (i, 0)),
            pl.BlockSpec((1, 2, f_out), lambda i, k: (i, 0, 0)),
        ),
        out_shape=(
            jax.ShapeDtypeStruct((n_p, f_out), jnp.bfloat16),   # bf16 z (memory-bound consumers)
            jax.ShapeDtypeStruct((nb, 2, f_out), jnp.float32),  # packed (sum, sumsq) partials
        ),
        scratch_shapes=[pltpu.VMEM((tm, f_in), jnp.float32)],
        compiler_params=pltpu.CompilerParams(
            dimension_semantics=("parallel", "arbitrary")),
        cost_estimate=cost,
    )(a_p, x_p, x_p, inv_deg, w_l, w_r, bias)


def _bn_relu_call(z, scale, shift, tm, out_dtype):
    n_p, f = z.shape
    nb = n_p // tm
    return pl.pallas_call(
        _bn_relu_kernel,
        grid=(nb,),
        in_specs=[
            pl.BlockSpec((tm, f), lambda i: (i, 0)),
            pl.BlockSpec((1, f), lambda i: (0, 0)),
            pl.BlockSpec((1, f), lambda i: (0, 0)),
        ],
        out_specs=pl.BlockSpec((tm, f), lambda i: (i, 0)),
        out_shape=jax.ShapeDtypeStruct((n_p, f), out_dtype),
        compiler_params=pltpu.CompilerParams(dimension_semantics=("parallel",)),
    )(z, scale, shift)


def _epilogue_call(z2, scale2, shift2, x_p, wres_t, bres, tm):
    n_p, f_out = z2.shape
    f_in = x_p.shape[1]
    nb = n_p // tm
    return pl.pallas_call(
        _bn_relu_residual_kernel,
        grid=(nb,),
        in_specs=[
            pl.BlockSpec((tm, f_out), lambda i: (i, 0)),
            pl.BlockSpec((1, f_out), lambda i: (0, 0)),
            pl.BlockSpec((1, f_out), lambda i: (0, 0)),
            pl.BlockSpec((tm, f_in), lambda i: (i, 0)),
            pl.BlockSpec((f_in, f_out), lambda i: (0, 0)),
            pl.BlockSpec((1, f_out), lambda i: (0, 0)),
        ],
        out_specs=pl.BlockSpec((tm, f_out), lambda i: (i, 0)),
        out_shape=jax.ShapeDtypeStruct((n_p, f_out), jnp.float32),
        compiler_params=pltpu.CompilerParams(dimension_semantics=("parallel",)),
    )(z2, scale2, shift2, x_p, wres_t, bres)


def _bn_scale_shift(stats, gamma_p, beta_p, n_valid):
    """Finish the global BN reduction from packed per-tile partials (tiny per-feature algebra)."""
    s = jnp.sum(stats[:, 0, :], axis=0, keepdims=True)    # (1, F)
    ss = jnp.sum(stats[:, 1, :], axis=0, keepdims=True)
    mu = s / n_valid
    ex2 = ss / n_valid
    var = jnp.maximum(ex2 - mu * mu, 0.0)                  # biased var (training-mode BN)
    scale = gamma_p * jax.lax.rsqrt(var + _EPS)
    shift = beta_p - mu * scale
    return scale, shift


# ----------------------------------------------------------------------------- forward
@jax.jit
def residual_block_forward(x, edge_index, params):
    """x: [N, in_dim] f32, edge_index: [2, E] int32 (row0 = src, row1 = dst)."""
    n, in_dim = x.shape
    hidden_dim = params["w1l"].shape[0]
    out_dim = params["w2l"].shape[0]

    # padded / tiled geometry (lane-dense feature dims, row tile multiple of 8)
    fin_p = _round_up(in_dim, _LANE)
    hid_p = _round_up(hidden_dim, _LANE)
    out_p = _round_up(out_dim, _LANE)
    tm = min(_ROW_TILE, _round_up(n, 8))
    n_p = _round_up(n, tm)
    tk = min(_K_TILE, n_p)      # n_p is a multiple of tk by construction

    # glue: exact 0/1 adjacency built directly in bf16 + f32 inverse degree (scatter-add
    # has no clean Pallas equivalent; mean normalization is applied in-kernel after A@X)
    src, dst = edge_index[0], edge_index[1]
    a_p = jnp.zeros((n_p, n_p), jnp.bfloat16).at[dst, src].add(jnp.bfloat16(1.0))
    deg = jnp.zeros((n_p,), jnp.float32).at[dst].add(1.0)
    inv_deg = jnp.where(deg > 0, 1.0 / jnp.maximum(deg, 1.0), 0.0).reshape(n_p, 1)

    x_p = _pad2(x, n_p, fin_p).astype(jnp.bfloat16)

    # glue: pre-transposed, zero-padded, bf16 weights; f32 biases / BN params
    w1l_t = _pad2(params["w1l"].T, fin_p, hid_p).astype(jnp.bfloat16)
    w1r_t = _pad2(params["w1r"].T, fin_p, hid_p).astype(jnp.bfloat16)
    b1 = _pad2(params["b1l"], 1, hid_p)
    w2l_t = _pad2(params["w2l"].T, hid_p, out_p).astype(jnp.bfloat16)
    w2r_t = _pad2(params["w2r"].T, hid_p, out_p).astype(jnp.bfloat16)
    b2 = _pad2(params["b2l"], 1, out_p)
    wres_t = _pad2(params["wres"].T, fin_p, out_p).astype(jnp.bfloat16)
    bres = _pad2(params["bres"], 1, out_p)
    g1 = _pad2(params["g1"], 1, hid_p)
    be1 = _pad2(params["be1"], 1, hid_p)
    g2 = _pad2(params["g2"], 1, out_p)
    be2 = _pad2(params["be2"], 1, out_p)

    # layer 1: K-tiled fused SAGEConv + masked BN stat partials, then BN1 + ReLU
    # (dropout = identity at inference)
    z1, st1 = _sage_call(a_p, x_p, inv_deg, w1l_t, w1r_t, b1, n, tm, tk)
    scale1, shift1 = _bn_scale_shift(st1, g1, be1, n)
    h1 = _bn_relu_call(z1, scale1, shift1, tm, jnp.bfloat16)

    # layer 2 + BN2 + ReLU + residual Linear epilogue
    z2, st2 = _sage_call(a_p, h1, inv_deg, w2l_t, w2r_t, b2, n, tm, tk)
    scale2, shift2 = _bn_scale_shift(st2, g2, be2, n)
    out = _epilogue_call(z2, scale2, shift2, x_p, wres_t, bres, tm)

    return out[:n, :out_dim]


# ----------------------------------------------------------------------------- params / reference
def init_params(key, in_dim, hidden_dim, out_dim):
    ks = jax.random.split(key, 10)
    u = lambda k, shape, fan: jax.random.uniform(
        k, shape, jnp.float32, -1.0, 1.0) / jnp.sqrt(jnp.float32(fan))
    if in_dim != out_dim:
        wres, bres = u(ks[6], (out_dim, in_dim), in_dim), u(ks[7], (1, out_dim), in_dim)
    else:  # residual_conv = nn.Identity()  ->  identity weights, zero bias
        wres, bres = jnp.eye(out_dim, dtype=jnp.float32), jnp.zeros((1, out_dim), jnp.float32)
    return {
        # SAGEConv1: lin_l (with bias) on aggregated neighbors, lin_r (no bias) on self.
        "w1l": u(ks[0], (hidden_dim, in_dim), in_dim),
        "b1l": u(ks[1], (1, hidden_dim), in_dim),
        "w1r": u(ks[2], (hidden_dim, in_dim), in_dim),
        "g1": jnp.ones((1, hidden_dim), jnp.float32),
        "be1": jnp.zeros((1, hidden_dim), jnp.float32),
        # SAGEConv2
        "w2l": u(ks[3], (out_dim, hidden_dim), hidden_dim),
        "b2l": u(ks[4], (1, out_dim), hidden_dim),
        "w2r": u(ks[5], (out_dim, hidden_dim), hidden_dim),
        "g2": jnp.ones((1, out_dim), jnp.float32),
        "be2": jnp.zeros((1, out_dim), jnp.float32),
        # residual_conv
        "wres": wres,
        "bres": bres,
    }


def _reference_forward(x, edge_index, params):
    """Plain-JAX f32 reference of the PyTorch module (inference mode)."""
    n = x.shape[0]
    src, dst = edge_index[0], edge_index[1]
    adj = jnp.zeros((n, n), jnp.float32).at[dst, src].add(1.0)
    deg = jnp.sum(adj, axis=1, keepdims=True)
    adj = jnp.where(deg > 0, adj / jnp.maximum(deg, 1.0), 0.0)

    def sage(h, wl, bl, wr):
        return (adj @ h) @ wl.T + bl + h @ wr.T

    def bn(h, g, b):
        mu = jnp.mean(h, axis=0, keepdims=True)
        var = jnp.mean((h - mu) ** 2, axis=0, keepdims=True)
        return g * (h - mu) * jax.lax.rsqrt(var + _EPS) + b

    residual = x @ params["wres"].T + params["bres"]
    h = jax.nn.relu(bn(sage(x, params["w1l"], params["b1l"], params["w1r"]),
                       params["g1"], params["be1"]))
    h2 = jax.nn.relu(bn(sage(h, params["w2l"], params["b2l"], params["w2r"]),
                        params["g2"], params["be2"]))
    return h2 + residual


if __name__ == "__main__":
    key = jax.random.PRNGKey(0)
    k_x, k_e, k_p = jax.random.split(key, 3)

    N, E = 16, 48
    in_dim, hidden_dim, out_dim = 16, 32, 24
    dropout_rate = 0.5  # inference -> dropout is identity

    x = jax.random.normal(k_x, (N, in_dim), jnp.float32)
    edge_index = jax.random.randint(k_e, (2, E), 0, N, jnp.int32)
    params = init_params(k_p, in_dim, hidden_dim, out_dim)

    out = residual_block_forward(x, edge_index, params)
    jax.block_until_ready(out)
    assert out.shape == (N, out_dim) and out.dtype == jnp.float32

    ref = _reference_forward(x, edge_index, params)
    err = float(jnp.max(jnp.abs(out - ref)))
    assert bool(jnp.all(jnp.isfinite(out))) and err < 0.25, f"max|err|={err}"
    print("KERNEL_OK")
</pallas_src>

<mosaic_0001>
module attributes {stable_mosaic.version = 11 : i64} {
  func.func private @main(%arg0: i32) attributes {dimension_semantics = [#tpu.dimension_semantics<core_parallel>], iteration_bounds = array<i64: 2>, tpu.core_type = #tpu.core_type<sc_scalar_subcore>, window_params = []} {
    return
  }
}

module attributes {stable_mosaic.version = 11 : i64} {
  func.func private @main(%arg0: i32) attributes {dimension_semantics = [#tpu.dimension_semantics<core_parallel>], iteration_bounds = array<i64: 2>, tpu.core_type = #tpu.core_type<sc_scalar_subcore>, window_params = []} {
    return
  }
}

module attributes {stable_mosaic.version = 11 : i64} {
  func.func @_bn_relu_kernel(%arg0: i32, %arg1: memref<16x128xbf16, #tpu.memory_space<vmem>>, %arg2: memref<1x128xf32, #tpu.memory_space<vmem>>, %arg3: memref<1x128xf32, #tpu.memory_space<vmem>>, %arg4: memref<16x128xbf16, #tpu.memory_space<vmem>>) attributes {dimension_semantics = [#tpu.dimension_semantics<parallel>], iteration_bounds = array<i64: 1>, scalar_prefetch = 0 : i64, scratch_operands = 0 : i64, tpu.core_type = #tpu.core_type<tc>, window_params = [{transform_indices = @transform_0, window_bounds = array<i64: 16, 128>}, {pipeline_mode = #tpu.pipeline_mode<synchronous>, transform_indices = @transform_1, window_bounds = array<i64: 1, 128>}, {pipeline_mode = #tpu.pipeline_mode<synchronous>, transform_indices = @transform_2, window_bounds = array<i64: 1, 128>}, {transform_indices = @transform_3, window_bounds = array<i64: 16, 128>}]} {
    %c0 = arith.constant 0 : index
    %c0_0 = arith.constant 0 : index
    %0 = vector.load %arg1[%c0, %c0_0] : memref<16x128xbf16, #tpu.memory_space<vmem>>, vector<16x128xbf16>
    %1 = arith.extf %0 : vector<16x128xbf16> to vector<16x128xf32>
    %c0_1 = arith.constant 0 : index
    %c0_2 = arith.constant 0 : index
    %2 = vector.load %arg2[%c0_1, %c0_2] : memref<1x128xf32, #tpu.memory_space<vmem>>, vector<1x128xf32>
    %3 = vector.broadcast %2 : vector<1x128xf32> to vector<16x128xf32>
    %4 = arith.mulf %1, %3 : vector<16x128xf32>
    %c0_3 = arith.constant 0 : index
    %c0_4 = arith.constant 0 : index
    %5 = vector.load %arg3[%c0_3, %c0_4] : memref<1x128xf32, #tpu.memory_space<vmem>>, vector<1x128xf32>
    %6 = vector.broadcast %5 : vector<1x128xf32> to vector<16x128xf32>
    %7 = arith.addf %4, %6 : vector<16x128xf32>
    %cst = arith.constant 0.000000e+00 : f32
    %8 = vector.broadcast %cst : f32 to vector<16x128xf32>
    %9 = arith.maximumf %7, %8 : vector<16x128xf32>
    %10 = arith.truncf %9 : vector<16x128xf32> to vector<16x128xbf16>
    %c0_5 = arith.constant 0 : index
    %c0_6 = arith.constant 0 : index
    %11 = vector.load %arg4[%c0_5, %c0_6] : memref<16x128xbf16, #tpu.memory_space<vmem>>, vector<16x128xbf16>
    tpu.vector_store %arg4[%c0_5, %c0_6], %10 {strides = array<i32>} : memref<16x128xbf16, #tpu.memory_space<vmem>>, vector<16x128xbf16>,
    return
  }
  func.func @transform_0(%arg0: i32) -> (i32, i32) {
    %c0_i32 = arith.constant 0 : i32
    %c0_i32_0 = arith.constant 0 : i32
    return %arg0, %c0_i32 : i32, i32
  }
  func.func @transform_1(%arg0: i32) -> (i32, i32) {
    %c0_i32 = arith.constant 0 : i32
    %c0_i32_0 = arith.constant 0 : i32
    %c0_i32_1 = arith.constant 0 : i32
    return %c0_i32, %c0_i32_0 : i32, i32
  }
  func.func @transform_2(%arg0: i32) -> (i32, i32) {
    %c0_i32 = arith.constant 0 : i32
    %c0_i32_0 = arith.constant 0 : i32
    %c0_i32_1 = arith.constant 0 : i32
    return %c0_i32, %c0_i32_0 : i32, i32
  }
  func.func @transform_3(%arg0: i32) -> (i32, i32) {
    %c0_i32 = arith.constant 0 : i32
    %c0_i32_0 = arith.constant 0 : i32
    return %arg0, %c0_i32 : i32, i32
  }
}

module attributes {stable_mosaic.version = 11 : i64} {
  func.func @_sage_kernel(%arg0: i32, %arg1: i32, %arg2: memref<16x16xbf16, #tpu.memory_space<vmem>>, %arg3: memref<16x128xbf16, #tpu.memory_space<vmem>>, %arg4: memref<16x128xbf16, #tpu.memory_space<vmem>>, %arg5: memref<16x1xf32, #tpu.memory_space<vmem>>, %arg6: memref<128x128xbf16, #tpu.memory_space<vmem>>, %arg7: memref<128x128xbf16, #tpu.memory_space<vmem>>, %arg8: memref<1x128xf32, #tpu.memory_space<vmem>>, %arg9: memref<16x128xbf16, #tpu.memory_space<vmem>>, %arg10: memref<1x2x128xf32, #tpu.memory_space<vmem>>, %arg11: memref<16x128xf32, #tpu.memory_space<vmem>>) attributes {dimension_semantics = [#tpu.dimension_semantics<parallel>, #tpu.dimension_semantics<arbitrary>], iteration_bounds = array<i64: 1, 1>, scalar_prefetch = 0 : i64, scratch_operands = 1 : i64, tpu.core_type = #tpu.core_type<tc>, window_params = [{transform_indices = @transform_0, window_bounds = array<i64: 16, 16>}, {transform_indices = @transform_1, window_bounds = array<i64: 16, 128>}, {transform_indices = @transform_2, window_bounds = array<i64: 16, 128>}, {transform_indices = @transform_3, window_bounds = array<i64: 16, 1>}, {pipeline_mode = #tpu.pipeline_mode<synchronous>, transform_indices = @transform_4, window_bounds = array<i64: 128, 128>}, {pipeline_mode = #tpu.pipeline_mode<synchronous>, transform_indices = @transform_5, window_bounds = array<i64: 128, 128>}, {pipeline_mode = #tpu.pipeline_mode<synchronous>, transform_indices = @transform_6, window_bounds = array<i64: 1, 128>}, {transform_indices = @transform_7, window_bounds = array<i64: 16, 128>}, {transform_indices = @transform_8, window_bounds = array<i64: 1, 2, 128>}]} {
    %c0_i32 = arith.constant 0 : i32
    %0 = arith.cmpi eq, %arg1, %c0_i32 : i32
    %1 = arith.extui %0 : i1 to i32
    %c0_i32_0 = arith.constant 0 : i32
    %2 = arith.cmpi ne, %1, %c0_i32_0 : i32
    scf.if %2 {
      %cst_10 = arith.constant 0.000000e+00 : f32
      %12 = vector.broadcast %cst_10 : f32 to vector<16x128xf32>
      %c0_11 = arith.constant 0 : index
      %c0_12 = arith.constant 0 : index
      %13 = vector.load %arg11[%c0_11, %c0_12] : memref<16x128xf32, #tpu.memory_space<vmem>>, vector<16x128xf32>
      tpu.vector_store %arg11[%c0_11, %c0_12], %12 {strides = array<i32>} : memref<16x128xf32, #tpu.memory_space<vmem>>, vector<16x128xf32>,
    } else {
    }
    %c0 = arith.constant 0 : index
    %c0_1 = arith.constant 0 : index
    %3 = vector.load %arg11[%c0, %c0_1] : memref<16x128xf32, #tpu.memory_space<vmem>>, vector<16x128xf32>
    %c0_2 = arith.constant 0 : index
    %c0_3 = arith.constant 0 : index
    %4 = vector.load %arg2[%c0_2, %c0_3] : memref<16x16xbf16, #tpu.memory_space<vmem>>, vector<16x16xbf16>
    %c0_4 = arith.constant 0 : index
    %c0_5 = arith.constant 0 : index
    %5 = vector.load %arg3[%c0_4, %c0_5] : memref<16x128xbf16, #tpu.memory_space<vmem>>, vector<16x128xbf16>
    %cst = arith.constant dense<0.000000e+00> : vector<16x128xf32>
    %6 = tpu.matmul %4, %5, %cst {dimension_numbers = #tpu.dot_dimension_numbers<[1], [0], [0], [1], [0, 0, 1, 1], [], []>} : vector<16x16xbf16>, vector<16x128xbf16>, vector<16x128xf32> -> vector<16x128xf32>
    %7 = arith.addf %3, %6 : vector<16x128xf32>
    %c0_6 = arith.constant 0 : index
    %c0_7 = arith.constant 0 : index
    %8 = vector.load %arg11[%c0_6, %c0_7] : memref<16x128xf32, #tpu.memory_space<vmem>>, vector<16x128xf32>
    tpu.vector_store %arg11[%c0_6, %c0_7], %7 {strides = array<i32>} : memref<16x128xf32, #tpu.memory_space<vmem>>, vector<16x128xf32>,
    %c0_i32_8 = arith.constant 0 : i32
    %9 = arith.cmpi eq, %arg1, %c0_i32_8 : i32
    %10 = arith.extui %9 : i1 to i32
    %c0_i32_9 = arith.constant 0 : i32
    %11 = arith.cmpi ne, %10, %c0_i32_9 : i32
    scf.if %11 {
      %c0_10 = arith.constant 0 : index
      %c0_11 = arith.constant 0 : index
      %12 = vector.load %arg11[%c0_10, %c0_11] : memref<16x128xf32, #tpu.memory_space<vmem>>, vector<16x128xf32>
      %c0_12 = arith.constant 0 : index
      %c0_13 = arith.constant 0 : index
      %13 = vector.load %arg5[%c0_12, %c0_13] : memref<16x1xf32, #tpu.memory_space<vmem>>, vector<16x1xf32>
      %14 = vector.broadcast %13 : vector<16x1xf32> to vector<16x128xf32>
      %15 = arith.mulf %12, %14 : vector<16x128xf32>
      %16 = arith.truncf %15 : vector<16x128xf32> to vector<16x128xbf16>
      %c0_14 = arith.constant 0 : index
      %c0_15 = arith.constant 0 : index
      %17 = vector.load %arg6[%c0_14, %c0_15] : memref<128x128xbf16, #tpu.memory_space<vmem>>, vector<128x128xbf16>
      %cst_16 = arith.constant dense<0.000000e+00> : vector<16x128xf32>
      %18 = tpu.matmul %16, %17, %cst_16 {dimension_numbers = #tpu.dot_dimension_numbers<[1], [0], [0], [1], [0, 0, 1, 1], [], []>} : vector<16x128xbf16>, vector<128x128xbf16>, vector<16x128xf32> -> vector<16x128xf32>
      %c0_17 = arith.constant 0 : index
      %c0_18 = arith.constant 0 : index
      %19 = vector.load %arg4[%c0_17, %c0_18] : memref<16x128xbf16, #tpu.memory_space<vmem>>, vector<16x128xbf16>
      %c0_19 = arith.constant 0 : index
      %c0_20 = arith.constant 0 : index
      %20 = vector.load %arg7[%c0_19, %c0_20] : memref<128x128xbf16, #tpu.memory_space<vmem>>, vector<128x128xbf16>
      %cst_21 = arith.constant dense<0.000000e+00> : vector<16x128xf32>
      %21 = tpu.matmul %19, %20, %cst_21 {dimension_numbers = #tpu.dot_dimension_numbers<[1], [0], [0], [1], [0, 0, 1, 1], [], []>} : vector<16x128xbf16>, vector<128x128xbf16>, vector<16x128xf32> -> vector<16x128xf32>
      %22 = arith.addf %18, %21 : vector<16x128xf32>
      %c0_22 = arith.constant 0 : index
      %c0_23 = arith.constant 0 : index
      %23 = vector.load %arg8[%c0_22, %c0_23] : memref<1x128xf32, #tpu.memory_space<vmem>>, vector<1x128xf32>
      %24 = vector.broadcast %23 : vector<1x128xf32> to vector<16x128xf32>
      %25 = arith.addf %22, %24 : vector<16x128xf32>
      %26 = arith.truncf %25 : vector<16x128xf32> to vector<16x128xbf16>
      %c0_24 = arith.constant 0 : index
      %c0_25 = arith.constant 0 : index
      %27 = vector.load %arg9[%c0_24, %c0_25] : memref<16x128xbf16, #tpu.memory_space<vmem>>, vector<16x128xbf16>
      tpu.vector_store %arg9[%c0_24, %c0_25], %26 {strides = array<i32>} : memref<16x128xbf16, #tpu.memory_space<vmem>>, vector<16x128xbf16>,
      %c16_i32 = arith.constant 16 : i32
      %28 = arith.muli %arg0, %c16_i32 : i32
      %29 = tpu.iota {dimensions = array<i32: 0>} : vector<16x1xi32>
      %30 = vector.broadcast %28 : i32 to vector<16x1xi32>
      %31 = arith.addi %30, %29 : vector<16x1xi32>
      %c16_i32_26 = arith.constant 16 : i32
      %32 = vector.broadcast %c16_i32_26 : i32 to vector<16x1xi32>
      %33 = arith.cmpi slt, %31, %32 : vector<16x1xi32>
      %cst_27 = arith.constant 0.000000e+00 : f32
      %34 = vector.shape_cast %33 : vector<16x1xi1> to vector<16x1xi1>
      %35 = vector.broadcast %34 : vector<16x1xi1> to vector<16x128xi1>
      %36 = vector.broadcast %cst_27 : f32 to vector<16x128xf32>
      %37 = arith.select %35, %25, %36 : vector<16x128xi1>, vector<16x128xf32>
      %cst_28 = arith.constant dense<0.000000e+00> : vector<128xf32>
      %38 = vector.multi_reduction <add>, %37, %cst_28 [0] : vector<16x128xf32> to vector<128xf32>
      %39 = vector.shape_cast %38 : vector<128xf32> to vector<1x128xf32>
      %40 = arith.mulf %37, %37 : vector<16x128xf32>
      %cst_29 = arith.constant dense<0.000000e+00> : vector<128xf32>
      %41 = vector.multi_reduction <add>, %40, %cst_29 [0] : vector<16x128xf32> to vector<128xf32>
      %42 = vector.shape_cast %41 : vector<128xf32> to vector<1x128xf32>
      %43 = tpu.concatenate %39, %42 in 0 : vector<1x128xf32>, vector<1x128xf32> -> vector<2x128xf32>
      %44 = vector.shape_cast %43 : vector<2x128xf32> to vector<1x2x128xf32>
      %c0_30 = arith.constant 0 : index
      %c0_31 = arith.constant 0 : index
      %c0_32 = arith.constant 0 : index
      %45 = vector.load %arg10[%c0_30, %c0_31, %c0_32] : memref<1x2x128xf32, #tpu.memory_space<vmem>>, vector<1x2x128xf32>
      tpu.vector_store %arg10[%c0_30, %c0_31, %c0_32], %44 {strides = array<i32>} : memref<1x2x128xf32, #tpu.memory_space<vmem>>, vector<1x2x128xf32>,
    } else {
    }
    return
  }
  func.func @transform_0(%arg0: i32, %arg1: i32) -> (i32, i32) {
    %c0_i32 = arith.constant 0 : i32
    return %arg0, %arg1 : i32, i32
  }
  func.func @transform_1(%arg0: i32, %arg1: i32) -> (i32, i32) {
    %c0_i32 = arith.constant 0 : i32
    %c0_i32_0 = arith.constant 0 : i32
    return %arg1, %c0_i32 : i32, i32
  }
  func.func @transform_2(%arg0: i32, %arg1: i32) -> (i32, i32) {
    %c0_i32 = arith.constant 0 : i32
    %c0_i32_0 = arith.constant 0 : i32
    return %arg0, %c0_i32 : i32, i32
  }
  func.func @transform_3(%arg0: i32, %arg1: i32) -> (i32, i32) {
    %c0_i32 = arith.constant 0 : i32
    %c0_i32_0 = arith.constant 0 : i32
    return %arg0, %c0_i32 : i32, i32
  }
  func.func @transform_4(%arg0: i32, %arg1: i32) -> (i32, i32) {
    %c0_i32 = arith.constant 0 : i32
    %c0_i32_0 = arith.constant 0 : i32
    %c0_i32_1 = arith.constant 0 : i32
    return %c0_i32, %c0_i32_0 : i32, i32
  }
  func.func @transform_5(%arg0: i32, %arg1: i32) -> (i32, i32) {
    %c0_i32 = arith.constant 0 : i32
    %c0_i32_0 = arith.constant 0 : i32
    %c0_i32_1 = arith.constant 0 : i32
    return %c0_i32, %c0_i32_0 : i32, i32
  }
  func.func @transform_6(%arg0: i32, %arg1: i32) -> (i32, i32) {
    %c0_i32 = arith.constant 0 : i32
    %c0_i32_0 = arith.constant 0 : i32
    %c0_i32_1 = arith.constant 0 : i32
    return %c0_i32, %c0_i32_0 : i32, i32
  }
  func.func @transform_7(%arg0: i32, %arg1: i32) -> (i32, i32) {
    %c0_i32 = arith.constant 0 : i32
    %c0_i32_0 = arith.constant 0 : i32
    return %arg0, %c0_i32 : i32, i32
  }
  func.func @transform_8(%arg0: i32, %arg1: i32) -> (i32, i32, i32) {
    %c0_i32 = arith.constant 0 : i32
    %c0_i32_0 = arith.constant 0 : i32
    %c0_i32_1 = arith.constant 0 : i32
    return %arg0, %c0_i32, %c0_i32_0 : i32, i32, i32
  }
}

module attributes {stable_mosaic.version = 11 : i64} {
  func.func @_bn_relu_residual_kernel(%arg0: i32, %arg1: memref<16x128xbf16, #tpu.memory_space<vmem>>, %arg2: memref<1x128xf32, #tpu.memory_space<vmem>>, %arg3: memref<1x128xf32, #tpu.memory_space<vmem>>, %arg4: memref<16x128xbf16, #tpu.memory_space<vmem>>, %arg5: memref<128x128xbf16, #tpu.memory_space<vmem>>, %arg6: memref<1x128xf32, #tpu.memory_space<vmem>>, %arg7: memref<16x128xf32, #tpu.memory_space<vmem>>) attributes {dimension_semantics = [#tpu.dimension_semantics<parallel>], iteration_bounds = array<i64: 1>, scalar_prefetch = 0 : i64, scratch_operands = 0 : i64, tpu.core_type = #tpu.core_type<tc>, window_params = [{transform_indices = @transform_0, window_bounds = array<i64: 16, 128>}, {pipeline_mode = #tpu.pipeline_mode<synchronous>, transform_indices = @transform_1, window_bounds = array<i64: 1, 128>}, {pipeline_mode = #tpu.pipeline_mode<synchronous>, transform_indices = @transform_2, window_bounds = array<i64: 1, 128>}, {transform_indices = @transform_3, window_bounds = array<i64: 16, 128>}, {pipeline_mode = #tpu.pipeline_mode<synchronous>, transform_indices = @transform_4, window_bounds = array<i64: 128, 128>}, {pipeline_mode = #tpu.pipeline_mode<synchronous>, transform_indices = @transform_5, window_bounds = array<i64: 1, 128>}, {transform_indices = @transform_6, window_bounds = array<i64: 16, 128>}]} {
    %c0 = arith.constant 0 : index
    %c0_0 = arith.constant 0 : index
    %0 = vector.load %arg1[%c0, %c0_0] : memref<16x128xbf16, #tpu.memory_space<vmem>>, vector<16x128xbf16>
    %1 = arith.extf %0 : vector<16x128xbf16> to vector<16x128xf32>
    %c0_1 = arith.constant 0 : index
    %c0_2 = arith.constant 0 : index
    %2 = vector.load %arg2[%c0_1, %c0_2] : memref<1x128xf32, #tpu.memory_space<vmem>>, vector<1x128xf32>
    %3 = vector.broadcast %2 : vector<1x128xf32> to vector<16x128xf32>
    %4 = arith.mulf %1, %3 : vector<16x128xf32>
    %c0_3 = arith.constant 0 : index
    %c0_4 = arith.constant 0 : index
    %5 = vector.load %arg3[%c0_3, %c0_4] : memref<1x128xf32, #tpu.memory_space<vmem>>, vector<1x128xf32>
    %6 = vector.broadcast %5 : vector<1x128xf32> to vector<16x128xf32>
    %7 = arith.addf %4, %6 : vector<16x128xf32>
    %cst = arith.constant 0.000000e+00 : f32
    %8 = vector.broadcast %cst : f32 to vector<16x128xf32>
    %9 = arith.maximumf %7, %8 : vector<16x128xf32>
    %c0_5 = arith.constant 0 : index
    %c0_6 = arith.constant 0 : index
    %10 = vector.load %arg4[%c0_5, %c0_6] : memref<16x128xbf16, #tpu.memory_space<vmem>>, vector<16x128xbf16>
    %c0_7 = arith.constant 0 : index
    %c0_8 = arith.constant 0 : index
    %11 = vector.load %arg5[%c0_7, %c0_8] : memref<128x128xbf16, #tpu.memory_space<vmem>>, vector<128x128xbf16>
    %cst_9 = arith.constant dense<0.000000e+00> : vector<16x128xf32>
    %12 = tpu.matmul %10, %11, %cst_9 {dimension_numbers = #tpu.dot_dimension_numbers<[1], [0], [0], [1], [0, 0, 1, 1], [], []>} : vector<16x128xbf16>, vector<128x128xbf16>, vector<16x128xf32> -> vector<16x128xf32>
    %c0_10 = arith.constant 0 : index
    %c0_11 = arith.constant 0 : index
    %13 = vector.load %arg6[%c0_10, %c0_11] : memref<1x128xf32, #tpu.memory_space<vmem>>, vector<1x128xf32>
    %14 = vector.broadcast %13 : vector<1x128xf32> to vector<16x128xf32>
    %15 = arith.addf %12, %14 : vector<16x128xf32>
    %16 = arith.addf %9, %15 : vector<16x128xf32>
    %c0_12 = arith.constant 0 : index
    %c0_13 = arith.constant 0 : index
    %17 = vector.load %arg7[%c0_12, %c0_13] : memref<16x128xf32, #tpu.memory_space<vmem>>, vector<16x128xf32>
    tpu.vector_store %arg7[%c0_12, %c0_13], %16 {strides = array<i32>} : memref<16x128xf32, #tpu.memory_space<vmem>>, vector<16x128xf32>,
    return
  }
  func.func @transform_0(%arg0: i32) -> (i32, i32) {
    %c0_i32 = arith.constant 0 : i32
    %c0_i32_0 = arith.constant 0 : i32
    return %arg0, %c0_i32 : i32, i32
  }
  func.func @transform_1(%arg0: i32) -> (i32, i32) {
    %c0_i32 = arith.constant 0 : i32
    %c0_i32_0 = arith.constant 0 : i32
    %c0_i32_1 = arith.constant 0 : i32
    return %c0_i32, %c0_i32_0 : i32, i32
  }
  func.func @transform_2(%arg0: i32) -> (i32, i32) {
    %c0_i32 = arith.constant 0 : i32
    %c0_i32_0 = arith.constant 0 : i32
    %c0_i32_1 = arith.constant 0 : i32
    return %c0_i32, %c0_i32_0 : i32, i32
  }
  func.func @transform_3(%arg0: i32) -> (i32, i32) {
    %c0_i32 = arith.constant 0 : i32
    %c0_i32_0 = arith.constant 0 : i32
    return %arg0, %c0_i32 : i32, i32
  }
  func.func @transform_4(%arg0: i32) -> (i32, i32) {
    %c0_i32 = arith.constant 0 : i32
    %c0_i32_0 = arith.constant 0 : i32
    %c0_i32_1 = arith.constant 0 : i32
    return %c0_i32, %c0_i32_0 : i32, i32
  }
  func.func @transform_5(%arg0: i32) -> (i32, i32) {
    %c0_i32 = arith.constant 0 : i32
    %c0_i32_0 = arith.constant 0 : i32
    %c0_i32_1 = arith.constant 0 : i32
    return %c0_i32, %c0_i32_0 : i32, i32
  }
  func.func @transform_6(%arg0: i32) -> (i32, i32) {
    %c0_i32 = arith.constant 0 : i32
    %c0_i32_0 = arith.constant 0 : i32
    return %arg0, %c0_i32 : i32, i32
  }
}

</mosaic_0001>

<llo_original>
// kernel: residual_block_forward.5
$region0: #{residual_block_forward.5}
  #allocation0 [shape = 'u32[]', space=smem, size = 0x4, offset = 0x4, fixed_abs, tag = 'smem constant byte address 0x4 - core index']
  #allocation1 [shape = 'u32[144,128]{1,0:T(1,128)}', space=vmem, size = 0x12000, scoped, tag = 'internal scratch']
  %s0 = inlined_call_operand.vmem [shape: bf16[16,128], index: 0, kind: input, shape index: {}]
  %s1 = inlined_call_operand.vmem [shape: f32[1,128], index: 1, kind: input, shape index: {}]
  %s2 = inlined_call_operand.vmem [shape: f32[1,128], index: 2, kind: input, shape index: {}]
  %s3 = inlined_call_operand.vmem [shape: bf16[16,128], index: 3, kind: output, shape index: {}]
  %s4 = sld [smem:[#allocation0]]
  $region22: #{residual_block_forward.5} parent=0
    _
  %s6 = ssub.s32 1, %s4
  %s7 = scalar_select 0, %s6, %s4
  // Predicated region
  $region2: #{residual_block_forward.5} parent=0 // pred_check
    _
  $region3: #{residual_block_forward.5} parent=0 // pred_check_branch
    %9 = sbr.rel (0) target = $region5
  $region4: #{residual_block_forward.5} parent=0 // pred_region
    _
  $region5: #{residual_block_forward.5} parent=0 // pred_fallthru
    _
  // Predicated region
  $region6: #{residual_block_forward.5} parent=0 // pred_check
    _
  $region7: #{residual_block_forward.5} parent=0 // pred_check_branch
    %11 = sbr.rel (0) target = $region9
  $region8: #{residual_block_forward.5} parent=0 // pred_region
    _
  $region9: #{residual_block_forward.5} parent=0 // pred_fallthru
    _
  // Predicated region
  $region10: #{residual_block_forward.5} parent=0 // pred_check
    _
  $region11: #{residual_block_forward.5} parent=0 // pred_check_branch
    %13 = sbr.rel (0) target = $region13
  $region12: #{residual_block_forward.5} parent=0 // pred_region
    _
  $region13: #{residual_block_forward.5} parent=0 // pred_fallthru
    _
  %v14 = vld [vmem:[%s0] sm:$0xf]
  %v15 = vld [vmem:[%s0 + $0x4] sm:$0xf]
  %v16 = vunpack.c.l.bf16 %v14
  %v17 = vunpack.c.l.bf16 %v15
  %v18 = vld [vmem:[%s1] sm:$0x1]
  %v20 = vlaneseq
  %v21 = vshrl.u32 %v20, 7
  %v22 = vsub.s32 0, %v21
  %v23 = vrot.slane %v18, %v22
  %v25 = vmul.f32 %v16, %v23
  %v26 = vmul.f32 %v17, %v23
  %v27 = vld [vmem:[%s2] sm:$0x1]
  %v29 = vlaneseq
  %v30 = vshrl.u32 %v29, 7
  %v31 = vsub.s32 0, %v30
  %v32 = vrot.slane %v27, %v31
  %v34 = vadd.f32 %v25, %v32
  %v35 = vadd.f32 %v26, %v32
  %v36 = vmax.f32 %v34, 0.0
  %v37 = vmax.f32 %v35, 0.0
  %v38 = vpack.c.bf16 %v37, %v36
  %v40 = vunpack.c.l.b16 %v38
  %v41 = vunpack.c.h.b16 %v38
  %v42 = vpack.c.b16 %v40, %v40
  %v43 = vpack.c.b16 %v41, %v41
  %46 = vst [vmem:[%s3] sm:$0xf] %v42
  %47 = vst [vmem:[%s3 + $0x4] sm:$0xf] %v43
  // Predicated region
  $region14: #{residual_block_forward.5} parent=0 // pred_check
    _
  $region15: #{residual_block_forward.5} parent=0 // pred_check_branch
    %49 = sbr.rel (0) target = $region17
  $region16: #{residual_block_forward.5} parent=0 // pred_region
    _
  $region17: #{residual_block_forward.5} parent=0 // pred_fallthru
    _
  // Predicated region
  $region18: #{residual_block_forward.5} parent=0 // pred_check
    _
  $region19: #{residual_block_forward.5} parent=0 // pred_check_branch
    %51 = sbr.rel (0) target = $region21
  $region20: #{residual_block_forward.5} parent=0 // pred_region
    _
  $region21: #{residual_block_forward.5} parent=0 // pred_fallthru
    _

// kernel: residual_block_forward.7
$region0: #{residual_block_forward.7}
  #allocation0 [shape = 'u32[]', space=smem, size = 0x4, offset = 0x4, fixed_abs, tag = 'smem constant byte address 0x4 - core index']
  #allocation1 [shape = 'u32[144,128]{1,0:T(1,128)}', space=vmem, size = 0x12000, scoped, tag = 'internal scratch']
  %s0 = inlined_call_operand.vmem [shape: bf16[16,128], index: 0, kind: input, shape index: {}]
  %s1 = inlined_call_operand.vmem [shape: f32[1,128], index: 1, kind: input, shape index: {}]
  %s2 = inlined_call_operand.vmem [shape: f32[1,128], index: 2, kind: input, shape index: {}]
  %s3 = inlined_call_operand.vmem [shape: bf16[16,128], index: 3, kind: input, shape index: {}]
  %s4 = inlined_call_operand.vmem [shape: bf16[128,128], index: 4, kind: input, shape index: {}]
  %s5 = inlined_call_operand.vmem [shape: f32[1,128], index: 5, kind: input, shape index: {}]
  %s6 = inlined_call_operand.hbm [shape: f32[16,128], index: 6, kind: output, shape index: {}]
  %s7 = sld [smem:[#allocation0]]
  $region34: #{residual_block_forward.7} parent=0
    _
  %s9 = ssub.s32 1, %s7
  %s10 = scalar_select 0, %s9, %s7
  $region1: #{residual_block_forward.7} parent=0
    #allocation2 [shape = 'u8[8192]{0}', space=vmem, size = 0x2000, scoped, tag = 'output window, operand 0, single buffered']
    #allocation3 [shape = 's32[1]{0}', space=sflag, size = 0x4, scoped, tag = 'scoped memory for residual_block_forward.7']
    %11 = vsyncpa [#allocation3], 0
    // Predicated region
    $region2: #{residual_block_forward.7} parent=1 // pred_check
      _
    $region3: #{residual_block_forward.7} parent=1 // pred_check_branch
      %13 = sbr.rel (0) target = $region5
    $region4: #{residual_block_forward.7} parent=1 // pred_region
      _
    $region5: #{residual_block_forward.7} parent=1 // pred_fallthru
      _
    // Predicated region
    $region6: #{residual_block_forward.7} parent=1 // pred_check
      _
    $region7: #{residual_block_forward.7} parent=1 // pred_check_branch
      %15 = sbr.rel (0) target = $region9
    $region8: #{residual_block_forward.7} parent=1 // pred_region
      _
    $region9: #{residual_block_forward.7} parent=1 // pred_fallthru
      _
    // Predicated region
    $region10: #{residual_block_forward.7} parent=1 // pred_check
      _
    $region11: #{residual_block_forward.7} parent=1 // pred_check_branch
      %17 = sbr.rel (0) target = $region13
    $region12: #{residual_block_forward.7} parent=1 // pred_region
      _
    $region13: #{residual_block_forward.7} parent=1 // pred_fallthru
      _
    // Predicated region
    $region14: #{residual_block_forward.7} parent=1 // pred_check
      _
    $region15: #{residual_block_forward.7} parent=1 // pred_check_branch
      %19 = sbr.rel (0) target = $region17
    $region16: #{residual_block_forward.7} parent=1 // pred_region
      _
    $region17: #{residual_block_forward.7} parent=1 // pred_fallthru
      _
    // Predicated region
    $region18: #{residual_block_forward.7} parent=1 // pred_check
      _
    $region19: #{residual_block_forward.7} parent=1 // pred_check_branch
      %21 = sbr.rel (0) target = $region21
    $region20: #{residual_block_forward.7} parent=1 // pred_region
      _
    $region21: #{residual_block_forward.7} parent=1 // pred_fallthru
      _
    // Predicated region
    $region22: #{residual_block_forward.7} parent=1 // pred_check
      _
    $region23: #{residual_block_forward.7} parent=1 // pred_check_branch
      %23 = sbr.rel (0) target = $region25
    $region24: #{residual_block_forward.7} parent=1 // pred_region
      _
    $region25: #{residual_block_forward.7} parent=1 // pred_fallthru
      _
    %v25 = vld [vmem:[%s0] sm:$0xf]
    %v26 = vld [vmem:[%s0 + $0x4] sm:$0xf]
    %v27 = vunpack.c.l.bf16 %v25
    %v28 = vunpack.c.l.bf16 %v26
    %v29 = vld [vmem:[%s1] sm:$0x1]
    %v31 = vlaneseq
    %v32 = vshrl.u32 %v31, 7
    %v33 = vsub.s32 0, %v32
    %v34 = vrot.slane %v29, %v33
    %v36 = vmul.f32 %v27, %v34
    %v37 = vmul.f32 %v28, %v34
    %v38 = vld [vmem:[%s2] sm:$0x1]
    %v40 = vlaneseq
    %v41 = vshrl.u32 %v40, 7
    %v42 = vsub.s32 0, %v41
    %v43 = vrot.slane %v38, %v42
    %v45 = vadd.f32 %v36, %v43
    %v46 = vadd.f32 %v37, %v43
    %v47 = vmax.f32 %v45, 0.0
    %v48 = vmax.f32 %v46, 0.0
    %v49 = vld [vmem:[%s3] sm:$0xf]
    %v50 = vld [vmem:[%s3 + $0x4] sm:$0xf]
    %v51 = vld [vmem:[%s4] sm:$0xf]
    %v52 = vld [vmem:[%s4 + $0x4] sm:$0xf]
    %v53 = vld [vmem:[%s4 + $0x8] sm:$0xf]
    %v54 = vld [vmem:[%s4 + $0xc] sm:$0xf]
    %v55 = vld [vmem:[%s4 + $0x10] sm:$0xf]
    %v56 = vld [vmem:[%s4 + $0x14] sm:$0xf]
    %v57 = vld [vmem:[%s4 + $0x18] sm:$0xf]
    %v58 = vld [vmem:[%s4 + $0x1c] sm:$0xf]
    %v59 = vld [vmem:[%s4 + $0x20] sm:$0xf]
    %v60 = vld [vmem:[%s4 + $0x24] sm:$0xf]
    %v61 = vld [vmem:[%s4 + $0x28] sm:$0xf]
    %v62 = vld [vmem:[%s4 + $0x2c] sm:$0xf]
    %v63 = vld [vmem:[%s4 + $0x30] sm:$0xf]
    %v64 = vld [vmem:[%s4 + $0x34] sm:$0xf]
    %v65 = vld [vmem:[%s4 + $0x38] sm:$0xf]
    %v66 = vld [vmem:[%s4 + $0x3c] sm:$0xf]
    %v67 = vld [vmem:[%s5] sm:$0x1]
    %v69 = vlaneseq
    %v70 = vshrl.u32 %v69, 7
    %v71 = vsub.s32 0, %v70
    %v72 = vrot.slane %v67, %v71
    %v76 = vunpack.c.l.b16 %v49
    %v77 = vunpack.c.l.b16 %v50
    %v78 = vpack.c.b16 %v77, %v76
    %v96 = vunpack.c.l.b16 %v51
    %v97 = vunpack.c.l.b16 %v52
    %v98 = vunpack.c.l.b16 %v53
    %v99 = vunpack.c.l.b16 %v54
    %v100 = vunpack.c.l.b16 %v55
    %v101 = vunpack.c.l.b16 %v56
    %v102 = vunpack.c.l.b16 %v57
    %v103 = vunpack.c.l.b16 %v58
    %v104 = vunpack.c.l.b16 %v59
    %v105 = vunpack.c.l.b16 %v60
    %v106 = vunpack.c.l.b16 %v61
    %v107 = vunpack.c.l.b16 %v62
    %v108 = vunpack.c.l.b16 %v63
    %v109 = vunpack.c.l.b16 %v64
    %v110 = vunpack.c.l.b16 %v65
    %v111 = vunpack.c.l.b16 %v66
    %v112 = vpack.c.b16 %v97, %v96
    %v113 = vpack.c.b16 %v99, %v98
    %v114 = vpack.c.b16 %v101, %v100
    %v115 = vpack.c.b16 %v103, %v102
    %v116 = vpack.c.b16 %v105, %v104
    %v117 = vpack.c.b16 %v107, %v106
    %v118 = vpack.c.b16 %v109, %v108
    %v119 = vpack.c.b16 %v111, %v110
    %128 = vmatprep.subr.bf16.mxu0 0
    %129 = vmatpush1.bf16.msra.mxu0 %v119
    %130 = vmatprep.subr.bf16.mxu0 0
    %131 = vmatpush1.bf16.msra.mxu0 %v118
    %132 = vmatprep.subr.bf16.mxu0 0
    %133 = vmatpush1.bf16.msra.mxu0 %v117
    %134 = vmatprep.subr.bf16.mxu0 0
    %135 = vmatpush1.bf16.msra.mxu0 %v116
    %136 = vmatprep.subr.bf16.mxu0 0
    %137 = vmatpush1.bf16.msra.mxu0 %v115
    %138 = vmatprep.subr.bf16.mxu0 0
    %139 = vmatpush1.bf16.msra.mxu0 %v114
    %140 = vmatprep.subr.bf16.mxu0 0
    %141 = vmatpush1.bf16.msra.mxu0 %v113
    %142 = vmatprep.subr.bf16.mxu0 0
    %143 = vmatpush1.bf16.msra.mxu0 %v112
    %144 = vmatprep.subr.bf16.mxu0 0
    %145 = vmatpush2.bf16.msra.mxu0 0
    %146 = vmatprep.subr.bf16.mxu0 0
    %147 = vmatpush2.bf16.msra.mxu0 0
    %148 = vmatprep.subr.bf16.mxu0 0
    %149 = vmatpush2.bf16.msra.mxu0 0
    %150 = vmatprep.subr.bf16.mxu0 0
    %151 = vmatpush2.bf16.msra.mxu0 0
    %152 = vmatprep.subr.bf16.mxu0 0
    %153 = vmatpush2.bf16.msra.mxu0 0
    %154 = vmatprep.subr.bf16.mxu0 0
    %155 = vmatpush2.bf16.msra.mxu0 0
    %156 = vmatprep.subr.bf16.mxu0 0
    %157 = vmatpush2.bf16.msra.mxu0 0
    %158 = vmatprep.subr.bf16.mxu0 0
    %159 = vmatpush2.bf16.msra.mxu0 0
    %160 = vmatprep.mubr.bf16.mxu0 0
    %161 = vmatmul.mubr.bf16.gmra.mxu0 %v78
    %v162 = vpop.f32.mrf.mxu0
    %v163 = vadd.f32 %v72, %v162
    %v164 = vpop.f32.mrf.mxu0
    %v165 = vpop.f32.mrf.mxu0
    %v166 = vadd.f32 %v72, %v165
    %v167 = vpop.f32.mrf.mxu0
    %168 = vdwg.mxu0
    %v169 = vadd.f32 %v47, %v163
    %v170 = vadd.f32 %v48, %v166
    %171 = vst [vmem:[#allocation2] sm:$0xff] %v169
    %172 = vst [vmem:[#allocation2 + $0x8] sm:$0xff] %v170
    // Predicated region
    $region26: #{residual_block_forward.7} parent=1 // pred_check
      _
    $region27: #{residual_block_forward.7} parent=1 // pred_check_branch
      %174 = sbr.rel (0) target = $region29
    $region28: #{residual_block_forward.7} parent=1 // pred_region
      %s176 = ssub.s32 256, 256
      %177 = vsyncadd [#allocation3], %s176
      %s178 = sshll.u32 [#allocation2], 4
      %s179 = int_to_ptr.vmem [resolvable:$true] %s178
      %184 = dma.vmem_to_hbm [thread:$0]  %s179, 256, %s6, [#allocation3], 128, 128, 8
    $region29: #{residual_block_forward.7} parent=1 // pred_fallthru
      _
    // Predicated region
    $region30: #{residual_block_forward.7} parent=1 // pred_check
      _
    $region31: #{residual_block_forward.7} parent=1 // pred_check_branch
      %186 = sbr.rel (0) target = $region33
    $region32: #{residual_block_forward.7} parent=1 // pred_region
      %187 = dma.done [#allocation3], 256
    $region33: #{residual_block_forward.7} parent=1 // pred_fallthru
      _
    %188 = vsyncpa [#allocation3], 1

// kernel: residual_block_forward.4
$region0: #{residual_block_forward.4}
  #allocation0 [shape = 'u32[]', space=smem, size = 0x4, offset = 0x4, fixed_abs, tag = 'smem constant byte address 0x4 - core index']
  #allocation1 [shape = 'u32[144,128]{1,0:T(1,128)}', space=vmem, size = 0x12000, scoped, tag = 'internal scratch']
  #allocation2 [shape = 'f32[16,128]{1,0:T(8,128)}', space=vmem, size = 0x2000, scoped, tag = 'scratch operand']
  %s0 = inlined_call_operand.vmem [shape: bf16[16,16], index: 0, kind: input, shape index: {}]
  %s1 = inlined_call_operand.vmem [shape: bf16[16,128], index: 1, kind: input, shape index: {}, may-alias: {1,2}]
  %s2 = inlined_call_operand.vmem [shape: bf16[16,128], index: 2, kind: input, shape index: {}, may-alias: {1,2}]
  %s3 = inlined_call_operand.vmem [shape: f32[16,1], index: 3, kind: input, shape index: {}]
  %s4 = inlined_call_operand.vmem [shape: bf16[128,128], index: 4, kind: input, shape index: {}]
  %s5 = inlined_call_operand.vmem [shape: bf16[128,128], index: 5, kind: input, shape index: {}]
  %s6 = inlined_call_operand.vmem [shape: f32[1,128], index: 6, kind: input, shape index: {}]
  %s7 = inlined_call_operand.vmem [shape: bf16[16,128], index: 7, kind: output, shape index: {0}]
  %s8 = inlined_call_operand.vmem [shape: f32[1,2,128], index: 8, kind: output, shape index: {1}]
  %9 = xla_tuple %s7, %s8
  %s10 = sld [smem:[#allocation0]]
  $region54: #{residual_block_forward.4} parent=0
    _
  %s12 = ssub.s32 1, %s10
  %s13 = scalar_select 0, %s12, %s10
  // Predicated region
  $region2: #{residual_block_forward.4} parent=0 // pred_check
    _
  $region3: #{residual_block_forward.4} parent=0 // pred_check_branch
    %15 = sbr.rel (0) target = $region5
  $region4: #{residual_block_forward.4} parent=0 // pred_region
    _
  $region5: #{residual_block_forward.4} parent=0 // pred_fallthru
    _
  // Predicated region
  $region6: #{residual_block_forward.4} parent=0 // pred_check
    _
  $region7: #{residual_block_forward.4} parent=0 // pred_check_branch
    %17 = sbr.rel (0) target = $region9
  $region8: #{residual_block_forward.4} parent=0 // pred_region
    _
  $region9: #{residual_block_forward.4} parent=0 // pred_fallthru
    _
  // Predicated region
  $region10: #{residual_block_forward.4} parent=0 // pred_check
    _
  $region11: #{residual_block_forward.4} parent=0 // pred_check_branch
    %19 = sbr.rel (0) target = $region13
  $region12: #{residual_block_forward.4} parent=0 // pred_region
    _
  $region13: #{residual_block_forward.4} parent=0 // pred_fallthru
    _
  // Predicated region
  $region14: #{residual_block_forward.4} parent=0 // pred_check
    _
  $region15: #{residual_block_forward.4} parent=0 // pred_check_branch
    %21 = sbr.rel (0) target = $region17
  $region16: #{residual_block_forward.4} parent=0 // pred_region
    _
  $region17: #{residual_block_forward.4} parent=0 // pred_fallthru
    _
  // Predicated region
  $region18: #{residual_block_forward.4} parent=0 // pred_check
    _
  $region19: #{residual_block_forward.4} parent=0 // pred_check_branch
    %23 = sbr.rel (0) target = $region21
  $region20: #{residual_block_forward.4} parent=0 // pred_region
    _
  $region21: #{residual_block_forward.4} parent=0 // pred_fallthru
    _
  // Predicated region
  $region22: #{residual_block_forward.4} parent=0 // pred_check
    _
  $region23: #{residual_block_forward.4} parent=0 // pred_check_branch
    %25 = sbr.rel (0) target = $region25
  $region24: #{residual_block_forward.4} parent=0 // pred_region
    _
  $region25: #{residual_block_forward.4} parent=0 // pred_fallthru
    _
  // Predicated region
  $region26: #{residual_block_forward.4} parent=0 // pred_check
    _
  $region27: #{residual_block_forward.4} parent=0 // pred_check_branch
    %27 = sbr.rel (0) target = $region29
  $region28: #{residual_block_forward.4} parent=0 // pred_region
    _
  $region29: #{residual_block_forward.4} parent=0 // pred_fallthru
    _
  %p29 = scmp.eq.s32.totalorder 0, 0
  // Predicated region
  $region30: #{residual_block_forward.4} parent=0 // pred_check
    %p30 = pneg %p29
  $region31: #{residual_block_forward.4} parent=0 // pred_check_branch
    %32 = sbr.rel (%p30) target = $region33
  $region32: #{residual_block_forward.4} parent=0 // pred_region
    %33 = vst [vmem:[#allocation2] sm:$0xff] 0.0
    %34 = vst [vmem:[#allocation2 + $0x8] sm:$0xff] 0.0
  $region33: #{residual_block_forward.4} parent=0 // pred_fallthru
    _
  %v35 = vld [vmem:[#allocation2] sm:$0xff]
  %v36 = vld [vmem:[#allocation2 + $0x8] sm:$0xff]
  %v37 = vld [vmem:[%s0] sm:$0xf]
  %v38 = vld [vmem:[%s0 + $0x4] sm:$0xf]
  %v39 = vld [vmem:[%s1] sm:$0xf]
  %v40 = vld [vmem:[%s1 + $0x4] sm:$0xf]
  %v43 = vunpack.c.l.b16 %v37
  %v44 = vunpack.c.l.b16 %v38
  %v45 = vpack.c.b16 %v44, %v43
  %v48 = vunpack.c.l.b16 %v39
  %v49 = vunpack.c.l.b16 %v40
  %v50 = vpack.c.b16 %v49, %v48
  %vm52 = vcmask 130048
  %v54 = vsel %vm52, %v45, 0
  %56 = vmatprep.subr.bf16.mxu0 0
  %57 = vmatpush1.bf16.msra.mxu0 0
  %58 = vmatprep.subr.bf16.mxu0 0
  %59 = vmatpush1.bf16.msra.mxu0 0
  %60 = vmatprep.subr.bf16.mxu0 0
  %61 = vmatpush1.bf16.msra.mxu0 0
  %62 = vmatprep.subr.bf16.mxu0 0
  %63 = vmatpush1.bf16.msra.mxu0 0
  %64 = vmatprep.subr.bf16.mxu0 0
  %65 = vmatpush1.bf16.msra.mxu0 0
  %66 = vmatprep.subr.bf16.mxu0 0
  %67 = vmatpush1.bf16.msra.mxu0 0
  %68 = vmatprep.subr.bf16.mxu0 0
  %69 = vmatpush1.bf16.msra.mxu0 0
  %70 = vmatprep.subr.bf16.mxu0 0
  %71 = vmatpush1.bf16.msra.mxu0 %v50
  %72 = vmatprep.subr.bf16.mxu0 0
  %73 = vmatpush2.bf16.msra.mxu0 0
  %74 = vmatprep.subr.bf16.mxu0 0
  %75 = vmatpush2.bf16.msra.mxu0 0
  %76 = vmatprep.subr.bf16.mxu0 0
  %77 = vmatpush2.bf16.msra.mxu0 0
  %78 = vmatprep.subr.bf16.mxu0 0
  %79 = vmatpush2.bf16.msra.mxu0 0
  %80 = vmatprep.subr.bf16.mxu0 0
  %81 = vmatpush2.bf16.msra.mxu0 0
  %82 = vmatprep.subr.bf16.mxu0 0
  %83 = vmatpush2.bf16.msra.mxu0 0
  %84 = vmatprep.subr.bf16.mxu0 0
  %85 = vmatpush2.bf16.msra.mxu0 0
  %86 = vmatprep.subr.bf16.mxu0 0
  %87 = vmatpush2.bf16.msra.mxu0 0
  %88 = vmatprep.mubr.bf16.mxu0 0
  %89 = vmatmul.mubr.bf16.gmra.mxu0 %v54
  %v90 = vpop.f32.mrf.mxu0
  %v91 = vadd.f32 0.0, %v90
  %v92 = vpop.f32.mrf.mxu0
  %v93 = vpop.f32.mrf.mxu0
  %v94 = vadd.f32 0.0, %v93
  %v95 = vpop.f32.mrf.mxu0
  %96 = vdwg.mxu0
  %v97 = vadd.f32 %v35, %v91
  %v98 = vadd.f32 %v36, %v94
  %99 = vst [vmem:[#allocation2] sm:$0xff] %v97
  %100 = vst [vmem:[#allocation2 + $0x8] sm:$0xff] %v98
  // Predicated region
  $region34: #{residual_block_forward.4} parent=0 // pred_check
    %p101 = pneg %p29
  $region35: #{residual_block_forward.4} parent=0 // pred_check_branch
    %103 = sbr.rel (%p101) target = $region37
  $region36: #{residual_block_forward.4} parent=0 // pred_region
    %v104 = vld [vmem:[#allocation2] sm:$0xff]
    %v105 = vld [vmem:[#allocation2 + $0x8] sm:$0xff]
    %v106 = vld [vmem:[%s3] sm:$0xff]
    %v107 = vld [vmem:[%s3 + $0x8] sm:$0xff]
    %109 = vset.pattern.permute.xlu0 0
    %110 = vperm.xlu0 %109, %v106
    %v111 = vpop.permute.xlu0 %110
    %114 = vset.pattern.permute.xlu0 0
    %115 = vperm.xlu0 %114, %v107
    %v116 = vpop.permute.xlu0 %115
    %v118 = vmul.f32 %v104, %v111
    %v119 = vmul.f32 %v105, %v116
    %v120 = vpack.c.bf16 %v119, %v118
    %v121 = vld [vmem:[%s4] sm:$0xf]
    %v122 = vld [vmem:[%s4 + $0x4] sm:$0xf]
    %v123 = vld [vmem:[%s4 + $0x8] sm:$0xf]
    %v124 = vld [vmem:[%s4 + $0xc] sm:$0xf]
    %v125 = vld [vmem:[%s4 + $0x10] sm:$0xf]
    %v126 = vld [vmem:[%s4 + $0x14] sm:$0xf]
    %v127 = vld [vmem:[%s4 + $0x18] sm:$0xf]
    %v128 = vld [vmem:[%s4 + $0x1c] sm:$0xf]
    %v129 = vld [vmem:[%s4 + $0x20] sm:$0xf]
    %v130 = vld [vmem:[%s4 + $0x24] sm:$0xf]
    %v131 = vld [vmem:[%s4 + $0x28] sm:$0xf]
    %v132 = vld [vmem:[%s4 + $0x2c] sm:$0xf]
    %v133 = vld [vmem:[%s4 + $0x30] sm:$0xf]
    %v134 = vld [vmem:[%s4 + $0x34] sm:$0xf]
    %v135 = vld [vmem:[%s4 + $0x38] sm:$0xf]
    %v136 = vld [vmem:[%s4 + $0x3c] sm:$0xf]
    %v137 = vld [vmem:[%s2] sm:$0xf]
    %v138 = vld [vmem:[%s2 + $0x4] sm:$0xf]
    %v139 = vld [vmem:[%s5] sm:$0xf]
    %v140 = vld [vmem:[%s5 + $0x4] sm:$0xf]
    %v141 = vld [vmem:[%s5 + $0x8] sm:$0xf]
    %v142 = vld [vmem:[%s5 + $0xc] sm:$0xf]
    %v143 = vld [vmem:[%s5 + $0x10] sm:$0xf]
    %v144 = vld [vmem:[%s5 + $0x14] sm:$0xf]
    %v145 = vld [vmem:[%s5 + $0x18] sm:$0xf]
    %v146 = vld [vmem:[%s5 + $0x1c] sm:$0xf]
    %v147 = vld [vmem:[%s5 + $0x20] sm:$0xf]
    %v148 = vld [vmem:[%s5 + $0x24] sm:$0xf]
    %v149 = vld [vmem:[%s5 + $0x28] sm:$0xf]
    %v150 = vld [vmem:[%s5 + $0x2c] sm:$0xf]
    %v151 = vld [vmem:[%s5 + $0x30] sm:$0xf]
    %v152 = vld [vmem:[%s5 + $0x34] sm:$0xf]
    %v153 = vld [vmem:[%s5 + $0x38] sm:$0xf]
    %v154 = vld [vmem:[%s5 + $0x3c] sm:$0xf]
    %v157 = vunpack.c.l.b16 %v137
    %v158 = vunpack.c.l.b16 %v138
    %v159 = vpack.c.b16 %v158, %v157
    %v177 = vunpack.c.l.b16 %v139
    %v178 = vunpack.c.l.b16 %v140
    %v179 = vunpack.c.l.b16 %v141
    %v180 = vunpack.c.l.b16 %v142
    %v181 = vunpack.c.l.b16 %v143
    %v182 = vunpack.c.l.b16 %v144
    %v183 = vunpack.c.l.b16 %v145
    %v184 = vunpack.c.l.b16 %v146
    %v185 = vunpack.c.l.b16 %v147
    %v186 = vunpack.c.l.b16 %v148
    %v187 = vunpack.c.l.b16 %v149
    %v188 = vunpack.c.l.b16 %v150
    %v189 = vunpack.c.l.b16 %v151
    %v190 = vunpack.c.l.b16 %v152
    %v191 = vunpack.c.l.b16 %v153
    %v192 = vunpack.c.l.b16 %v154
    %v193 = vpack.c.b16 %v178, %v177
    %v194 = vpack.c.b16 %v180, %v179
    %v195 = vpack.c.b16 %v182, %v181
    %v196 = vpack.c.b16 %v184, %v183
    %v197 = vpack.c.b16 %v186, %v185
    %v198 = vpack.c.b16 %v188, %v187
    %v199 = vpack.c.b16 %v190, %v189
    %v200 = vpack.c.b16 %v192, %v191
    %209 = vmatprep.subr.bf16.mxu0 0
    %210 = vmatpush1.bf16.msra.mxu0 %v200
    %211 = vmatprep.subr.bf16.mxu0 0
    %212 = vmatpush1.bf16.msra.mxu0 %v199
    %213 = vmatprep.subr.bf16.mxu0 0
    %214 = vmatpush1.bf16.msra.mxu0 %v198
    %215 = vmatprep.subr.bf16.mxu0 0
    %216 = vmatpush1.bf16.msra.mxu0 %v197
    %217 = vmatprep.subr.bf16.mxu0 0
    %218 = vmatpush1.bf16.msra.mxu0 %v196
    %219 = vmatprep.subr.bf16.mxu0 0
    %220 = vmatpush1.bf16.msra.mxu0 %v195
    %221 = vmatprep.subr.bf16.mxu0 0
    %222 = vmatpush1.bf16.msra.mxu0 %v194
    %223 = vmatprep.subr.bf16.mxu0 0
    %224 = vmatpush1.bf16.msra.mxu0 %v193
    %225 = vmatprep.subr.bf16.mxu0 0
    %226 = vmatpush2.bf16.msra.mxu0 0
    %227 = vmatprep.subr.bf16.mxu0 0
    %228 = vmatpush2.bf16.msra.mxu0 0
    %229 = vmatprep.subr.bf16.mxu0 0
    %230 = vmatpush2.bf16.msra.mxu0 0
    %231 = vmatprep.subr.bf16.mxu0 0
    %232 = vmatpush2.bf16.msra.mxu0 0
    %233 = vmatprep.subr.bf16.mxu0 0
    %234 = vmatpush2.bf16.msra.mxu0 0
    %235 = vmatprep.subr.bf16.mxu0 0
    %236 = vmatpush2.bf16.msra.mxu0 0
    %237 = vmatprep.subr.bf16.mxu0 0
    %238 = vmatpush2.bf16.msra.mxu0 0
    %239 = vmatprep.subr.bf16.mxu0 0
    %240 = vmatpush2.bf16.msra.mxu0 0
    %241 = vmatprep.mubr.bf16.mxu0 0
    %242 = vmatmul.mubr.bf16.gmra.mxu0 %v159
    %v243 = vpop.f32.mrf.mxu0
    %v244 = vadd.f32 0.0, %v243
    %v245 = vpop.f32.mrf.mxu0
    %v246 = vpop.f32.mrf.mxu0
    %v247 = vadd.f32 0.0, %v246
    %v248 = vpop.f32.mrf.mxu0
    %249 = vdwg.mxu0
    %v266 = vunpack.c.l.b16 %v121
    %v267 = vunpack.c.l.b16 %v122
    %v268 = vunpack.c.l.b16 %v123
    %v269 = vunpack.c.l.b16 %v124
    %v270 = vunpack.c.l.b16 %v125
    %v271 = vunpack.c.l.b16 %v126
    %v272 = vunpack.c.l.b16 %v127
    %v273 = vunpack.c.l.b16 %v128
    %v274 = vunpack.c.l.b16 %v129
    %v275 = vunpack.c.l.b16 %v130
    %v276 = vunpack.c.l.b16 %v131
    %v277 = vunpack.c.l.b16 %v132
    %v278 = vunpack.c.l.b16 %v133
    %v279 = vunpack.c.l.b16 %v134
    %v280 = vunpack.c.l.b16 %v135
    %v281 = vunpack.c.l.b16 %v136
    %v282 = vpack.c.b16 %v267, %v266
    %v283 = vpack.c.b16 %v269, %v268
    %v284 = vpack.c.b16 %v271, %v270
    %v285 = vpack.c.b16 %v273, %v272
    %v286 = vpack.c.b16 %v275, %v274
    %v287 = vpack.c.b16 %v277, %v276
    %v288 = vpack.c.b16 %v279, %v278
    %v289 = vpack.c.b16 %v281, %v280
    %298 = vmatprep.subr.bf16.mxu0 0
    %299 = vmatpush1.bf16.msra.mxu0 %v289
    %300 = vmatprep.subr.bf16.mxu0 0
    %301 = vmatpush1.bf16.msra.mxu0 %v288
    %302 = vmatprep.subr.bf16.mxu0 0
    %303 = vmatpush1.bf16.msra.mxu0 %v287
    %304 = vmatprep.subr.bf16.mxu0 0
    %305 = vmatpush1.bf16.msra.mxu0 %v286
    %306 = vmatprep.subr.bf16.mxu0 0
    %307 = vmatpush1.bf16.msra.mxu0 %v285
    %308 = vmatprep.subr.bf16.mxu0 0
    %309 = vmatpush1.bf16.msra.mxu0 %v284
    %310 = vmatprep.subr.bf16.mxu0 0
    %311 = vmatpush1.bf16.msra.mxu0 %v283
    %312 = vmatprep.subr.bf16.mxu0 0
    %313 = vmatpush1.bf16.msra.mxu0 %v282
    %314 = vmatprep.subr.bf16.mxu0 0
    %315 = vmatpush2.bf16.msra.mxu0 0
    %316 = vmatprep.subr.bf16.mxu0 0
    %317 = vmatpush2.bf16.msra.mxu0 0
    %318 = vmatprep.subr.bf16.mxu0 0
    %319 = vmatpush2.bf16.msra.mxu0 0
    %320 = vmatprep.subr.bf16.mxu0 0
    %321 = vmatpush2.bf16.msra.mxu0 0
    %322 = vmatprep.subr.bf16.mxu0 0
    %323 = vmatpush2.bf16.msra.mxu0 0
    %324 = vmatprep.subr.bf16.mxu0 0
    %325 = vmatpush2.bf16.msra.mxu0 0
    %326 = vmatprep.subr.bf16.mxu0 0
    %327 = vmatpush2.bf16.msra.mxu0 0
    %328 = vmatprep.subr.bf16.mxu0 0
    %329 = vmatpush2.bf16.msra.mxu0 0
    %330 = vmatprep.mubr.bf16.mxu0 0
    %331 = vmatmul.mubr.bf16.gmra.mxu0 %v120
    %v332 = vpop.f32.mrf.mxu0
    %v333 = vadd.f32 %v244, %v332
    %v334 = vpop.f32.mrf.mxu0
    %v335 = vpop.f32.mrf.mxu0
    %v336 = vadd.f32 %v247, %v335
    %v337 = vpop.f32.mrf.mxu0
    %338 = vdwg.mxu0
    %v339 = vld [vmem:[%s6] sm:$0x1]
    %v341 = vlaneseq
    %v342 = vshrl.u32 %v341, 7
    %v343 = vsub.s32 0, %v342
    %v344 = vrot.slane %v339, %v343
    %v346 = vadd.f32 %v333, %v344
    %v347 = vadd.f32 %v336, %v344
    %v348 = vpack.c.bf16 %v347, %v346
    %v350 = vunpack.c.l.b16 %v348
    %v351 = vunpack.c.h.b16 %v348
    %v352 = vpack.c.b16 %v350, %v350
    %v353 = vpack.c.b16 %v351, %v351
    %356 = vst [vmem:[%s7] sm:$0xf] %v352
    %357 = vst [vmem:[%s7 + $0x4] sm:$0xf] %v353
    %s358 = smul.u32 0, 16
    %v359 = vlaneseq
    %v360 = vshrl.u32 %v359, 7
    %v361 = vadd.s32 %v360, 8
    %v362 = vstv %s358
    %v363 = vadd.s32 %v362, %v360
    %v364 = vadd.s32 %v362, %v361
    %vm365 = vcmp.lt.s32.totalorder %v363, 16
    %vm366 = vcmp.lt.s32.totalorder %v364, 16
    %v367 = vsel %vm365, 1, 0
    %v368 = vsel %vm366, 1, 0
    %vm369 = vcmp.eq.s32.totalorder %v367, 1
    %vm370 = vcmp.eq.s32.totalorder %v368, 1
    %v371 = vsel %vm369, %v346, 0.0
    %v372 = vsel %vm370, %v347, 0.0
    %v373 = vadd.f32 %v371, %v372
    %v374 = vrot.slane %v373, 4
    %v375 = vadd.f32 %v373, %v374
    %v376 = vrot.slane %v375, 2
    %v377 = vadd.f32 %v375, %v376
    %v378 = vrot.slane %v377, 1
    %v379 = vadd.f32 %v377, %v378
    %v380 = vmul.f32 %v371, %v371
    %v381 = vmul.f32 %v372, %v372
    %v382 = vadd.f32 %v380, %v381
    %v383 = vrot.slane %v382, 4
    %v384 = vadd.f32 %v382, %v383
    %v385 = vrot.slane %v384, 2
    %v386 = vadd.f32 %v384, %v385
    %v387 = vrot.slane %v386, 1
    %v388 = vadd.f32 %v386, %v387
    %vm389 = vcmask 1040384
    %v390 = vsel %vm389, %v379, %v388
    %391 = vst [vmem:[%s8] sm:$0x3] %v390
  $region37: #{residual_block_forward.4} parent=0 // pred_fallthru
    _
  // Predicated region
  $region38: #{residual_block_forward.4} parent=0 // pred_check
    _
  $region39: #{residual_block_forward.4} parent=0 // pred_check_branch
    %393 = sbr.rel (0) target = $region41
  $region40: #{residual_block_forward.4} parent=0 // pred_region
    _
  $region41: #{residual_block_forward.4} parent=0 // pred_fallthru
    _
  // Predicated region
  $region42: #{residual_block_forward.4} parent=0 // pred_check
    _
  $region43: #{residual_block_forward.4} parent=0 // pred_check_branch
    %395 = sbr.rel (0) target = $region45
  $region44: #{residual_block_forward.4} parent=0 // pred_region
    _
  $region45: #{residual_block_forward.4} parent=0 // pred_fallthru
    _
  // Predicated region
  $region46: #{residual_block_forward.4} parent=0 // pred_check
    _
  $region47: #{residual_block_forward.4} parent=0 // pred_check_branch
    %397 = sbr.rel (0) target = $region49
  $region48: #{residual_block_forward.4} parent=0 // pred_region
    _
  $region49: #{residual_block_forward.4} parent=0 // pred_fallthru
    _
  // Predicated region
  $region50: #{residual_block_forward.4} parent=0 // pred_check
    _
  $region51: #{residual_block_forward.4} parent=0 // pred_check_branch
    %399 = sbr.rel (0) target = $region53
  $region52: #{residual_block_forward.4} parent=0 // pred_region
    _
  $region53: #{residual_block_forward.4} parent=0 // pred_fallthru
    _

</llo_original>
